<compile_context>
chip_gen: v7x
topology: tpu7x:2x2x1
jax: 0.10.0
libtpu: 0.0.40
codegen_flags: <defaults>
</compile_context>

<pallas_src>
import jax
import jax.numpy as jnp
from jax import lax
from jax.experimental import pallas as pl
from jax.experimental.pallas import tpu as pltpu

EPS = 1e-5


# ----------------------------- Pallas kernel --------------------------------
def _make_double_conv_kernel(W, Cin, Cout, inv_count):
    """inv_count = 1 / (N*H*W), closed over as a static Python float."""
    K1 = W * Cin
    K2 = W * Cout

    def kernel(x_ref, w1_ref, w2_ref, mask_ref, g1_ref, b1_ref, g2_ref, b2_ref,
               p_ref, o_ref, xc1_ref, xc2_ref):
        # x_ref  : (N*H, W*Cin)            packed input (lane = w*Cin + ci)
        # wk_ref : (3*W*Cin_k, W*Cout)     fused banded conv weights (ky-major)
        # mask   : (N*H, 2)                col 0: zero on image-top rows,
        #                                  col 1: zero on image-bottom rows
        # g/b    : (1, W*Cout)             BN gamma/beta tiled into lane layout
        # p_ref  : (W*Cout, W*Cout)        channel-group sum / broadcast matrix
        # o_ref  : (N*H, W*Cout)
        # xc1/xc2: VMEM scratch (N*H, 3*W*Cin) / (N*H, 3*W*Cout)
        x = x_ref[...]
        p = p_ref[...]
        mask_top = mask_ref[:, 0:1]      # (NH, 1)
        mask_bot = mask_ref[:, 1:2]      # (NH, 1)
        nh = x.shape[0]

        def conv_bn_relu(xin, k, w_ref, xcat_ref, gamma, beta):
            # dy = -1 / +1 row shifts with zero halo: XLU roll + VPU mask
            # (replaces the old (NH, NH) shift-matrix matmuls).
            x_prev = pltpu.roll(xin, shift=1, axis=0) * mask_top       # row r-1
            x_next = pltpu.roll(xin, shift=nh - 1, axis=0) * mask_bot  # row r+1
            # Pack the three ky bands lane-wise -> one K = 3*W*C MXU matmul.
            xcat_ref[:, 0:k] = x_prev
            xcat_ref[:, k:2 * k] = xin
            xcat_ref[:, 2 * k:3 * k] = x_next
            acc = jnp.dot(xcat_ref[...], w_ref[...],
                          preferred_element_type=jnp.float32)          # (NH, W*Cout)
            # Train-mode BN stats: reduce over rows first (XLU), then the tiny
            # channel-group matmul with P (also broadcasts back into the packed
            # (W*Cout) lane layout).
            rs = jnp.sum(acc, axis=0, keepdims=True)                   # (1, W*Cout)
            rs2 = jnp.sum(acc * acc, axis=0, keepdims=True)
            mean = jnp.dot(rs, p, preferred_element_type=jnp.float32) * inv_count
            ex2 = jnp.dot(rs2, p, preferred_element_type=jnp.float32) * inv_count
            var = ex2 - mean * mean
            scale = gamma * lax.rsqrt(var + EPS)
            shift = beta - mean * scale
            return jnp.maximum(acc * scale + shift, 0.0)               # FMA + ReLU

        y1 = conv_bn_relu(x, K1, w1_ref, xc1_ref, g1_ref[...], b1_ref[...])
        o_ref[...] = conv_bn_relu(y1, K2, w2_ref, xc2_ref, g2_ref[...], b2_ref[...])

    return kernel


# --------------------------- wrapper-side glue -------------------------------
def _band_weights(w_oihw, W):
    """(Cout, Cin, 3, 3) -> (3*W*Cin, W*Cout) fused banded conv matrix.

    Row index = ky*(W*Cin) + wi*Cin + ci, col index = wo*Cout + co, value =
    w[co, ci, ky, wi-wo+1] if |wi-wo| <= 1 else 0.  The zero band outside
    |wi-wo| <= 1 implements the W zero-padding; the ky-major row order matches
    the [x_prev | x | x_next] lane packing in the kernel.
    """
    Cout, Cin, _, _ = w_oihw.shape
    w_t = jnp.transpose(w_oihw.astype(jnp.float32), (2, 3, 1, 0))  # (ky,kx,ci,co)
    wi = jnp.arange(W)[:, None]
    wo = jnp.arange(W)[None, :]
    dx = wi - wo
    valid = (dx >= -1) & (dx <= 1)
    kx = jnp.clip(dx + 1, 0, 2)                  # (W, W)
    gathered = w_t[:, kx]                        # (3, W, W, Cin, Cout)
    banded = jnp.where(valid[None, :, :, None, None], gathered, 0.0)
    banded = jnp.transpose(banded, (0, 1, 3, 2, 4))   # (3, W, Cin, W, Cout)
    return banded.reshape(3 * W * Cin, W * Cout)


@jax.jit
def double_conv(x_nchw, params):
    """DoubleConv forward. Input/output are NCHW to match the PyTorch module."""
    (w1, b1, g1, be1, w2, b2, g2, be2) = params
    del b1, b2  # per-channel conv bias cancels under train-mode BatchNorm

    N, Cin, H, W = x_nchw.shape
    Cout = w1.shape[0]
    NH = N * H

    # Pack NCHW -> (N*H, W*Cin): lane index = w*Cin + ci (lane-dense output).
    x_p = jnp.transpose(x_nchw, (0, 2, 3, 1)).reshape(NH, W * Cin).astype(jnp.float32)

    m1 = _band_weights(w1, W)                    # (3*W*Cin,  W*Cout)
    m2 = _band_weights(w2, W)                    # (3*W*Cout, W*Cout)

    # Image-boundary masks for the rolled rows (zero halo at top/bottom rows).
    r = jnp.arange(NH)
    masks = jnp.stack([(r % H != 0), (r % H != H - 1)],
                      axis=1).astype(jnp.float32)            # (NH, 2)

    # Channel-group sum matrix: (v @ P)[j] = sum over lanes with channel j%Cout.
    lane = jnp.arange(W * Cout)
    p_mat = (lane[:, None] % Cout == lane[None, :] % Cout).astype(jnp.float32)

    g1t = jnp.tile(g1.astype(jnp.float32), W).reshape(1, W * Cout)
    be1t = jnp.tile(be1.astype(jnp.float32), W).reshape(1, W * Cout)
    g2t = jnp.tile(g2.astype(jnp.float32), W).reshape(1, W * Cout)
    be2t = jnp.tile(be2.astype(jnp.float32), W).reshape(1, W * Cout)

    inv_count = 1.0 / float(N * H * W)

    vmem = pl.BlockSpec(memory_space=pltpu.MemorySpace.VMEM)
    out2d = pl.pallas_call(
        _make_double_conv_kernel(W, Cin, Cout, inv_count),
        out_shape=jax.ShapeDtypeStruct((NH, W * Cout), jnp.float32),
        in_specs=[vmem] * 9,
        out_specs=vmem,
        scratch_shapes=[pltpu.VMEM((NH, 3 * W * Cin), jnp.float32),
                        pltpu.VMEM((NH, 3 * W * Cout), jnp.float32)],
    )(x_p, m1, m2, masks, g1t, be1t, g2t, be2t, p_mat)

    # (N*H, W*Cout) -> NCHW
    return jnp.transpose(out2d.reshape(N, H, W, Cout), (0, 3, 1, 2))


# ---------------------------- pure-JAX reference ----------------------------
def _ref_conv(x_nhwc, w_oihw, b):
    N, H, W, Cin = x_nhwc.shape
    Cout = w_oihw.shape[0]
    xp = jnp.pad(x_nhwc, ((0, 0), (1, 1), (1, 1), (0, 0)))
    wt = jnp.transpose(w_oihw, (2, 3, 1, 0))          # (3,3,Cin,Cout)
    acc = jnp.zeros((N, H, W, Cout), jnp.float32)
    for dy in range(3):
        for dx in range(3):
            acc = acc + jnp.einsum('nhwi,io->nhwo',
                                   xp[:, dy:dy + H, dx:dx + W, :], wt[dy, dx],
                                   precision='highest')
    return acc + b.reshape(1, 1, 1, Cout)


def _ref_bn_relu(y, gamma, beta):
    mean = jnp.mean(y, axis=(0, 1, 2), keepdims=True)
    var = jnp.mean((y - mean) ** 2, axis=(0, 1, 2), keepdims=True)
    yh = (y - mean) / jnp.sqrt(var + EPS)
    return jnp.maximum(yh * gamma.reshape(1, 1, 1, -1) + beta.reshape(1, 1, 1, -1), 0.0)


def _ref_double_conv(x_nchw, params):
    (w1, b1, g1, be1, w2, b2, g2, be2) = params
    x = jnp.transpose(x_nchw, (0, 2, 3, 1))
    y1 = _ref_bn_relu(_ref_conv(x, w1, b1), g1, be1)
    y2 = _ref_bn_relu(_ref_conv(y1, w2, b2), g2, be2)
    return jnp.transpose(y2, (0, 3, 1, 2))


# --------------------------------- main --------------------------------------
if __name__ == "__main__":
    in_channels, out_channels = 4, 8
    N, H, W = 2, 16, 16

    key = jax.random.PRNGKey(0)
    kx, kw1, kb1, kw2, kb2 = jax.random.split(key, 5)

    x = jax.random.normal(kx, (N, in_channels, H, W), jnp.float32)   # NCHW

    # Deterministic synthetic parameters (shapes match nn.Conv2d / nn.BatchNorm2d).
    w1 = 0.1 * jax.random.normal(kw1, (out_channels, in_channels, 3, 3), jnp.float32)
    b1 = 0.01 * jax.random.normal(kb1, (out_channels,), jnp.float32)
    g1 = jnp.ones((out_channels,), jnp.float32)       # BN weight init = 1
    be1 = jnp.zeros((out_channels,), jnp.float32)     # BN bias init = 0
    w2 = 0.1 * jax.random.normal(kw2, (out_channels, out_channels, 3, 3), jnp.float32)
    b2 = 0.01 * jax.random.normal(kb2, (out_channels,), jnp.float32)
    g2 = jnp.ones((out_channels,), jnp.float32)
    be2 = jnp.zeros((out_channels,), jnp.float32)

    params = (w1, b1, g1, be1, w2, b2, g2, be2)

    out = jax.block_until_ready(double_conv(x, params))
    assert out.shape == (N, out_channels, H, W), out.shape

    ref = jax.block_until_ready(_ref_double_conv(x, params))
    if not bool(jnp.allclose(out, ref, atol=1e-4, rtol=1e-4)):
        err = float(jnp.max(jnp.abs(out - ref)))
        raise AssertionError(f"Pallas DoubleConv does not match JAX reference (max err {err})")

    print("KERNEL_OK")
</pallas_src>

<mosaic_0001>
module attributes {stable_mosaic.version = 11 : i64} {
  func.func @kernel(%arg0: memref<32x64xf32, #tpu.memory_space<vmem>>, %arg1: memref<192x128xf32, #tpu.memory_space<vmem>>, %arg2: memref<384x128xf32, #tpu.memory_space<vmem>>, %arg3: memref<32x2xf32, #tpu.memory_space<vmem>>, %arg4: memref<1x128xf32, #tpu.memory_space<vmem>>, %arg5: memref<1x128xf32, #tpu.memory_space<vmem>>, %arg6: memref<1x128xf32, #tpu.memory_space<vmem>>, %arg7: memref<1x128xf32, #tpu.memory_space<vmem>>, %arg8: memref<128x128xf32, #tpu.memory_space<vmem>>, %arg9: memref<32x128xf32, #tpu.memory_space<vmem>>, %arg10: memref<32x192xf32, #tpu.memory_space<vmem>>, %arg11: memref<32x384xf32, #tpu.memory_space<vmem>>) attributes {dimension_semantics = [], scalar_prefetch = 0 : i64, scratch_operands = 2 : i64, tpu.core_type = #tpu.core_type<tc>} {
    %c0 = arith.constant 0 : index
    %c0_0 = arith.constant 0 : index
    %0 = vector.load %arg0[%c0, %c0_0] : memref<32x64xf32, #tpu.memory_space<vmem>>, vector<32x64xf32>
    %c0_1 = arith.constant 0 : index
    %c0_2 = arith.constant 0 : index
    %1 = vector.load %arg8[%c0_1, %c0_2] : memref<128x128xf32, #tpu.memory_space<vmem>>, vector<128x128xf32>
    %c0_3 = arith.constant 0 : index
    %c0_4 = arith.constant 0 : index
    %2 = vector.load %arg3[%c0_3, %c0_4] : memref<32x2xf32, #tpu.memory_space<vmem>>, vector<32x1xf32>
    %c0_5 = arith.constant 0 : index
    %c1 = arith.constant 1 : index
    %3 = vector.load %arg3[%c0_5, %c1] : memref<32x2xf32, #tpu.memory_space<vmem>>, vector<32x1xf32>
    %c0_6 = arith.constant 0 : index
    %c0_7 = arith.constant 0 : index
    %4 = vector.load %arg4[%c0_6, %c0_7] : memref<1x128xf32, #tpu.memory_space<vmem>>, vector<1x128xf32>
    %c0_8 = arith.constant 0 : index
    %c0_9 = arith.constant 0 : index
    %5 = vector.load %arg5[%c0_8, %c0_9] : memref<1x128xf32, #tpu.memory_space<vmem>>, vector<1x128xf32>
    %c1_i32 = arith.constant 1 : i32
    %6 = tpu.dynamic_rotate %0 by %c1_i32 dim 0 : vector<32x64xf32>, i32 -> vector<32x64xf32>
    %7 = vector.broadcast %2 : vector<32x1xf32> to vector<32x64xf32>
    %8 = arith.mulf %6, %7 : vector<32x64xf32>
    %c31_i32 = arith.constant 31 : i32
    %9 = tpu.dynamic_rotate %0 by %c31_i32 dim 0 : vector<32x64xf32>, i32 -> vector<32x64xf32>
    %10 = vector.broadcast %3 : vector<32x1xf32> to vector<32x64xf32>
    %11 = arith.mulf %9, %10 : vector<32x64xf32>
    %c0_10 = arith.constant 0 : index
    %c0_11 = arith.constant 0 : index
    %12 = vector.load %arg10[%c0_10, %c0_11] : memref<32x192xf32, #tpu.memory_space<vmem>>, vector<32x64xf32>
    tpu.vector_store %arg10[%c0_10, %c0_11], %8 {strides = array<i32>} : memref<32x192xf32, #tpu.memory_space<vmem>>, vector<32x64xf32>,
    %c0_12 = arith.constant 0 : index
    %c64 = arith.constant 64 : index
    %13 = vector.load %arg10[%c0_12, %c64] : memref<32x192xf32, #tpu.memory_space<vmem>>, vector<32x64xf32>
    tpu.vector_store %arg10[%c0_12, %c64], %0 {strides = array<i32>} : memref<32x192xf32, #tpu.memory_space<vmem>>, vector<32x64xf32>,
    %c0_13 = arith.constant 0 : index
    %c128 = arith.constant 128 : index
    %14 = vector.load %arg10[%c0_13, %c128] : memref<32x192xf32, #tpu.memory_space<vmem>>, vector<32x64xf32>
    tpu.vector_store %arg10[%c0_13, %c128], %11 {strides = array<i32>} : memref<32x192xf32, #tpu.memory_space<vmem>>, vector<32x64xf32>,
    %c0_14 = arith.constant 0 : index
    %c0_15 = arith.constant 0 : index
    %15 = vector.load %arg10[%c0_14, %c0_15] : memref<32x192xf32, #tpu.memory_space<vmem>>, vector<32x192xf32>
    %c0_16 = arith.constant 0 : index
    %c0_17 = arith.constant 0 : index
    %16 = vector.load %arg1[%c0_16, %c0_17] : memref<192x128xf32, #tpu.memory_space<vmem>>, vector<192x128xf32>
    %cst = arith.constant dense<0.000000e+00> : vector<32x128xf32>
    %17 = tpu.matmul %15, %16, %cst {dimension_numbers = #tpu.dot_dimension_numbers<[1], [0], [0], [1], [0, 0, 1, 1], [], []>} : vector<32x192xf32>, vector<192x128xf32>, vector<32x128xf32> -> vector<32x128xf32>
    %cst_18 = arith.constant dense<0.000000e+00> : vector<128xf32>
    %18 = vector.multi_reduction <add>, %17, %cst_18 [0] : vector<32x128xf32> to vector<128xf32>
    %19 = vector.shape_cast %18 : vector<128xf32> to vector<1x128xf32>
    %20 = arith.mulf %17, %17 : vector<32x128xf32>
    %cst_19 = arith.constant dense<0.000000e+00> : vector<128xf32>
    %21 = vector.multi_reduction <add>, %20, %cst_19 [0] : vector<32x128xf32> to vector<128xf32>
    %22 = vector.shape_cast %21 : vector<128xf32> to vector<1x128xf32>
    %cst_20 = arith.constant dense<0.000000e+00> : vector<1x128xf32>
    %23 = tpu.matmul %19, %1, %cst_20 {dimension_numbers = #tpu.dot_dimension_numbers<[1], [0], [0], [1], [0, 0, 1, 1], [], []>} : vector<1x128xf32>, vector<128x128xf32>, vector<1x128xf32> -> vector<1x128xf32>
    %cst_21 = arith.constant 0.001953125 : f32
    %24 = vector.broadcast %cst_21 : f32 to vector<1x128xf32>
    %25 = arith.mulf %23, %24 : vector<1x128xf32>
    %cst_22 = arith.constant dense<0.000000e+00> : vector<1x128xf32>
    %26 = tpu.matmul %22, %1, %cst_22 {dimension_numbers = #tpu.dot_dimension_numbers<[1], [0], [0], [1], [0, 0, 1, 1], [], []>} : vector<1x128xf32>, vector<128x128xf32>, vector<1x128xf32> -> vector<1x128xf32>
    %cst_23 = arith.constant 0.001953125 : f32
    %27 = vector.broadcast %cst_23 : f32 to vector<1x128xf32>
    %28 = arith.mulf %26, %27 : vector<1x128xf32>
    %29 = arith.mulf %25, %25 : vector<1x128xf32>
    %30 = arith.subf %28, %29 : vector<1x128xf32>
    %cst_24 = arith.constant 9.99999974E-6 : f32
    %31 = vector.broadcast %cst_24 : f32 to vector<1x128xf32>
    %32 = arith.addf %30, %31 : vector<1x128xf32>
    %33 = math.rsqrt %32 : vector<1x128xf32>
    %34 = arith.mulf %4, %33 : vector<1x128xf32>
    %35 = arith.mulf %25, %34 : vector<1x128xf32>
    %36 = arith.subf %5, %35 : vector<1x128xf32>
    %37 = vector.broadcast %34 : vector<1x128xf32> to vector<32x128xf32>
    %38 = arith.mulf %17, %37 : vector<32x128xf32>
    %39 = vector.broadcast %36 : vector<1x128xf32> to vector<32x128xf32>
    %40 = arith.addf %38, %39 : vector<32x128xf32>
    %cst_25 = arith.constant 0.000000e+00 : f32
    %41 = vector.broadcast %cst_25 : f32 to vector<32x128xf32>
    %42 = arith.maximumf %40, %41 : vector<32x128xf32>
    %c0_26 = arith.constant 0 : index
    %c0_27 = arith.constant 0 : index
    %43 = vector.load %arg6[%c0_26, %c0_27] : memref<1x128xf32, #tpu.memory_space<vmem>>, vector<1x128xf32>
    %c0_28 = arith.constant 0 : index
    %c0_29 = arith.constant 0 : index
    %44 = vector.load %arg7[%c0_28, %c0_29] : memref<1x128xf32, #tpu.memory_space<vmem>>, vector<1x128xf32>
    %c1_i32_30 = arith.constant 1 : i32
    %45 = tpu.dynamic_rotate %42 by %c1_i32_30 dim 0 : vector<32x128xf32>, i32 -> vector<32x128xf32>
    %46 = vector.broadcast %2 : vector<32x1xf32> to vector<32x128xf32>
    %47 = arith.mulf %45, %46 : vector<32x128xf32>
    %c31_i32_31 = arith.constant 31 : i32
    %48 = tpu.dynamic_rotate %42 by %c31_i32_31 dim 0 : vector<32x128xf32>, i32 -> vector<32x128xf32>
    %49 = vector.broadcast %3 : vector<32x1xf32> to vector<32x128xf32>
    %50 = arith.mulf %48, %49 : vector<32x128xf32>
    %c0_32 = arith.constant 0 : index
    %c0_33 = arith.constant 0 : index
    %51 = vector.load %arg11[%c0_32, %c0_33] : memref<32x384xf32, #tpu.memory_space<vmem>>, vector<32x128xf32>
    tpu.vector_store %arg11[%c0_32, %c0_33], %47 {strides = array<i32>} : memref<32x384xf32, #tpu.memory_space<vmem>>, vector<32x128xf32>,
    %c0_34 = arith.constant 0 : index
    %c128_35 = arith.constant 128 : index
    %52 = vector.load %arg11[%c0_34, %c128_35] : memref<32x384xf32, #tpu.memory_space<vmem>>, vector<32x128xf32>
    tpu.vector_store %arg11[%c0_34, %c128_35], %42 {strides = array<i32>} : memref<32x384xf32, #tpu.memory_space<vmem>>, vector<32x128xf32>,
    %c0_36 = arith.constant 0 : index
    %c256 = arith.constant 256 : index
    %53 = vector.load %arg11[%c0_36, %c256] : memref<32x384xf32, #tpu.memory_space<vmem>>, vector<32x128xf32>
    tpu.vector_store %arg11[%c0_36, %c256], %50 {strides = array<i32>} : memref<32x384xf32, #tpu.memory_space<vmem>>, vector<32x128xf32>,
    %c0_37 = arith.constant 0 : index
    %c0_38 = arith.constant 0 : index
    %54 = vector.load %arg11[%c0_37, %c0_38] : memref<32x384xf32, #tpu.memory_space<vmem>>, vector<32x384xf32>
    %c0_39 = arith.constant 0 : index
    %c0_40 = arith.constant 0 : index
    %55 = vector.load %arg2[%c0_39, %c0_40] : memref<384x128xf32, #tpu.memory_space<vmem>>, vector<384x128xf32>
    %cst_41 = arith.constant dense<0.000000e+00> : vector<32x128xf32>
    %56 = tpu.matmul %54, %55, %cst_41 {dimension_numbers = #tpu.dot_dimension_numbers<[1], [0], [0], [1], [0, 0, 1, 1], [], []>} : vector<32x384xf32>, vector<384x128xf32>, vector<32x128xf32> -> vector<32x128xf32>
    %cst_42 = arith.constant dense<0.000000e+00> : vector<128xf32>
    %57 = vector.multi_reduction <add>, %56, %cst_42 [0] : vector<32x128xf32> to vector<128xf32>
    %58 = vector.shape_cast %57 : vector<128xf32> to vector<1x128xf32>
    %59 = arith.mulf %56, %56 : vector<32x128xf32>
    %cst_43 = arith.constant dense<0.000000e+00> : vector<128xf32>
    %60 = vector.multi_reduction <add>, %59, %cst_43 [0] : vector<32x128xf32> to vector<128xf32>
    %61 = vector.shape_cast %60 : vector<128xf32> to vector<1x128xf32>
    %cst_44 = arith.constant dense<0.000000e+00> : vector<1x128xf32>
    %62 = tpu.matmul %58, %1, %cst_44 {dimension_numbers = #tpu.dot_dimension_numbers<[1], [0], [0], [1], [0, 0, 1, 1], [], []>} : vector<1x128xf32>, vector<128x128xf32>, vector<1x128xf32> -> vector<1x128xf32>
    %cst_45 = arith.constant 0.001953125 : f32
    %63 = vector.broadcast %cst_45 : f32 to vector<1x128xf32>
    %64 = arith.mulf %62, %63 : vector<1x128xf32>
    %cst_46 = arith.constant dense<0.000000e+00> : vector<1x128xf32>
    %65 = tpu.matmul %61, %1, %cst_46 {dimension_numbers = #tpu.dot_dimension_numbers<[1], [0], [0], [1], [0, 0, 1, 1], [], []>} : vector<1x128xf32>, vector<128x128xf32>, vector<1x128xf32> -> vector<1x128xf32>
    %cst_47 = arith.constant 0.001953125 : f32
    %66 = vector.broadcast %cst_47 : f32 to vector<1x128xf32>
    %67 = arith.mulf %65, %66 : vector<1x128xf32>
    %68 = arith.mulf %64, %64 : vector<1x128xf32>
    %69 = arith.subf %67, %68 : vector<1x128xf32>
    %cst_48 = arith.constant 9.99999974E-6 : f32
    %70 = vector.broadcast %cst_48 : f32 to vector<1x128xf32>
    %71 = arith.addf %69, %70 : vector<1x128xf32>
    %72 = math.rsqrt %71 : vector<1x128xf32>
    %73 = arith.mulf %43, %72 : vector<1x128xf32>
    %74 = arith.mulf %64, %73 : vector<1x128xf32>
    %75 = arith.subf %44, %74 : vector<1x128xf32>
    %76 = vector.broadcast %73 : vector<1x128xf32> to vector<32x128xf32>
    %77 = arith.mulf %56, %76 : vector<32x128xf32>
    %78 = vector.broadcast %75 : vector<1x128xf32> to vector<32x128xf32>
    %79 = arith.addf %77, %78 : vector<32x128xf32>
    %cst_49 = arith.constant 0.000000e+00 : f32
    %80 = vector.broadcast %cst_49 : f32 to vector<32x128xf32>
    %81 = arith.maximumf %79, %80 : vector<32x128xf32>
    %c0_50 = arith.constant 0 : index
    %c0_51 = arith.constant 0 : index
    %82 = vector.load %arg9[%c0_50, %c0_51] : memref<32x128xf32, #tpu.memory_space<vmem>>, vector<32x128xf32>
    tpu.vector_store %arg9[%c0_50, %c0_51], %81 {strides = array<i32>} : memref<32x128xf32, #tpu.memory_space<vmem>>, vector<32x128xf32>,
    return
  }
}

</mosaic_0001>

<llo_original>
// kernel: tile.23
$region0: #{tile.23}
  #allocation0 [shape = 's32[1]{0}', space=sflag, size = 0x4, scoped, tag = 'scoped memory for tile.23']
  %s0 = inlined_call_operand.vmem [shape: f32[8], index: 0, kind: input, shape index: {}]
  %s1 = inlined_call_operand.vmem [shape: f32[16,8], index: 1, kind: output, shape index: {}]
  // Predicated region
  $region2: #{tile.23} parent=0 // pred_check
    _
  $region3: #{tile.23} parent=0 // pred_check_branch
    %3 = sbr.rel (0) target = $region5
  $region4: #{tile.23} parent=0 // pred_region
    _
  $region5: #{tile.23} parent=0 // pred_fallthru
    _
  %v4 = vld [vmem:[%s0] ss:$0 sm:$0xff]
  %5 = vst [vmem:[%s1] sm:$0xff] %v4
  %s6 = scalar_lea.vmem %s1, 8
  %7 = vst [vmem:[%s6] sm:$0xff] %v4

// kernel: tile.24
$region0: #{tile.24}
  %s0 = inlined_call_operand.vmem [shape: f32[16,8], index: 0, kind: input, shape index: {}]
  %s1 = inlined_call_operand.vmem [shape: f32[1,128], index: 1, kind: output, shape index: {}]
  $region1: #{tile.24} parent=0
    #allocation0 [shape = 'u8[4096]{0}', space=vmem, size = 0x1000, scoped, tag = 'scoped mem for output reshape']
    %v2 = vld [vmem:[%s0] sm:$0x1]
    %vm3 = vcmask 64512
    %4 = vst.msk [vmem:[#allocation0] sm:$0x1] %vm3, %v2
    %s5 = scalar_lea.vmem %s0, 15
    %v6 = vld [vmem:[%s5] sm:$0x1]
    %7 = vrot.lane.b32.xlu0 %v6, 120
    %v8 = vpop.permute.xlu0 %7
    %vm9 = vcmask 1048512
    %10 = vst.msk [vmem:[#allocation0] sm:$0x1] %vm9, %v8
    %s11 = scalar_lea.vmem %s0, 14
    %v12 = vld [vmem:[%s11] sm:$0x1]
    %13 = vrot.lane.b32.xlu0 %v12, 112
    %v14 = vpop.permute.xlu0 %13
    %vm15 = vcmask 982912
    %16 = vst.msk [vmem:[#allocation0] sm:$0x1] %vm15, %v14
    %s17 = scalar_lea.vmem %s0, 13
    %v18 = vld [vmem:[%s17] sm:$0x1]
    %19 = vrot.lane.b32.xlu0 %v18, 104
    %v20 = vpop.permute.xlu0 %19
    %vm21 = vcmask 917312
    %22 = vst.msk [vmem:[#allocation0] sm:$0x1] %vm21, %v20
    %s23 = scalar_lea.vmem %s0, 12
    %v24 = vld [vmem:[%s23] sm:$0x1]
    %25 = vrot.lane.b32.xlu0 %v24, 96
    %v26 = vpop.permute.xlu0 %25
    %vm27 = vcmask 851712
    %28 = vst.msk [vmem:[#allocation0] sm:$0x1] %vm27, %v26
    %s29 = scalar_lea.vmem %s0, 11
    %v30 = vld [vmem:[%s29] sm:$0x1]
    %31 = vrot.lane.b32.xlu0 %v30, 88
    %v32 = vpop.permute.xlu0 %31
    %vm33 = vcmask 786112
    %34 = vst.msk [vmem:[#allocation0] sm:$0x1] %vm33, %v32
    %s35 = scalar_lea.vmem %s0, 10
    %v36 = vld [vmem:[%s35] sm:$0x1]
    %37 = vrot.lane.b32.xlu0 %v36, 80
    %v38 = vpop.permute.xlu0 %37
    %vm39 = vcmask 720512
    %40 = vst.msk [vmem:[#allocation0] sm:$0x1] %vm39, %v38
    %s41 = scalar_lea.vmem %s0, 9
    %v42 = vld [vmem:[%s41] sm:$0x1]
    %43 = vrot.lane.b32.xlu0 %v42, 72
    %v44 = vpop.permute.xlu0 %43
    %vm45 = vcmask 654912
    %46 = vst.msk [vmem:[#allocation0] sm:$0x1] %vm45, %v44
    %s47 = scalar_lea.vmem %s0, 8
    %v48 = vld [vmem:[%s47] sm:$0x1]
    %49 = vrot.lane.b32.xlu0 %v48, 64
    %v50 = vpop.permute.xlu0 %49
    %vm51 = vcmask 589312
    %52 = vst.msk [vmem:[#allocation0] sm:$0x1] %vm51, %v50
    %s53 = scalar_lea.vmem %s0, 7
    %v54 = vld [vmem:[%s53] sm:$0x1]
    %55 = vrot.lane.b32.xlu0 %v54, 56
    %v56 = vpop.permute.xlu0 %55
    %vm57 = vcmask 523712
    %58 = vst.msk [vmem:[#allocation0] sm:$0x1] %vm57, %v56
    %s59 = scalar_lea.vmem %s0, 6
    %v60 = vld [vmem:[%s59] sm:$0x1]
    %61 = vrot.lane.b32.xlu0 %v60, 48
    %v62 = vpop.permute.xlu0 %61
    %vm63 = vcmask 458112
    %64 = vst.msk [vmem:[#allocation0] sm:$0x1] %vm63, %v62
    %s65 = scalar_lea.vmem %s0, 5
    %v66 = vld [vmem:[%s65] sm:$0x1]
    %67 = vrot.lane.b32.xlu0 %v66, 40
    %v68 = vpop.permute.xlu0 %67
    %vm69 = vcmask 392512
    %70 = vst.msk [vmem:[#allocation0] sm:$0x1] %vm69, %v68
    %s71 = scalar_lea.vmem %s0, 4
    %v72 = vld [vmem:[%s71] sm:$0x1]
    %73 = vrot.lane.b32.xlu0 %v72, 32
    %v74 = vpop.permute.xlu0 %73
    %vm75 = vcmask 326912
    %76 = vst.msk [vmem:[#allocation0] sm:$0x1] %vm75, %v74
    %s77 = scalar_lea.vmem %s0, 3
    %v78 = vld [vmem:[%s77] sm:$0x1]
    %79 = vrot.lane.b32.xlu0 %v78, 24
    %v80 = vpop.permute.xlu0 %79
    %vm81 = vcmask 261312
    %82 = vst.msk [vmem:[#allocation0] sm:$0x1] %vm81, %v80
    %s83 = scalar_lea.vmem %s0, 2
    %v84 = vld [vmem:[%s83] sm:$0x1]
    %85 = vrot.lane.b32.xlu0 %v84, 16
    %v86 = vpop.permute.xlu0 %85
    %vm87 = vcmask 195712
    %88 = vst.msk [vmem:[#allocation0] sm:$0x1] %vm87, %v86
    %s89 = scalar_lea.vmem %s0, 1
    %v90 = vld [vmem:[%s89] sm:$0x1]
    %91 = vrot.lane.b32.xlu0 %v90, 8
    %v92 = vpop.permute.xlu0 %91
    %vm93 = vcmask 130112
    %94 = vst.msk [vmem:[#allocation0] sm:$0x1] %vm93, %v92
    %s96 = sshllo.u32 0, 1
    %v98 = vld [vmem:[#allocation0] sm:%s96]
    %s99 = sshllo.u32 0, 1
    %100 = vst [vmem:[%s1] sm:%s99] %v98

// kernel: double_conv.1
$region0: #{double_conv.1}
  #allocation0 [shape = 'u32[]', space=smem, size = 0x4, offset = 0x4, fixed_abs, tag = 'smem constant byte address 0x4 - core index']
  #allocation1 [shape = 'u32[144,128]{1,0:T(1,128)}', space=vmem, size = 0x12000, scoped, tag = 'internal scratch']
  #allocation2 [shape = 'f32[32,192]{1,0:T(8,128)}', space=vmem, size = 0x8000, scoped, tag = 'scratch operand']
  #allocation3 [shape = 'f32[32,384]{1,0:T(8,128)}', space=vmem, size = 0xc000, scoped, tag = 'scratch operand']
  %s0 = inlined_call_operand.vmem [shape: f32[32,64], index: 0, kind: input, shape index: {}]
  %s1 = inlined_call_operand.vmem [shape: f32[192,128], index: 1, kind: input, shape index: {}]
  %s2 = inlined_call_operand.vmem [shape: f32[384,128], index: 2, kind: input, shape index: {}]
  %s3 = inlined_call_operand.vmem [shape: f32[32,2], index: 3, kind: input, shape index: {}]
  %s4 = inlined_call_operand.vmem [shape: f32[1,128], index: 4, kind: input, shape index: {}]
  %s5 = inlined_call_operand.vmem [shape: f32[1,128], index: 5, kind: input, shape index: {}]
  %s6 = inlined_call_operand.vmem [shape: f32[1,128], index: 6, kind: input, shape index: {}]
  %s7 = inlined_call_operand.vmem [shape: f32[1,128], index: 7, kind: input, shape index: {}]
  %s8 = inlined_call_operand.vmem [shape: f32[128,128], index: 8, kind: input, shape index: {}]
  %s9 = inlined_call_operand.vmem [shape: f32[32,128], index: 9, kind: output, shape index: {}]
  %s10 = sld [smem:[#allocation0]]
  $region46: #{double_conv.1} parent=0
    _
  %s12 = ssub.s32 1, %s10
  %s13 = scalar_select 0, %s12, %s10
  // Predicated region
  $region2: #{double_conv.1} parent=0 // pred_check
    _
  $region3: #{double_conv.1} parent=0 // pred_check_branch
    %15 = sbr.rel (0) target = $region5
  $region4: #{double_conv.1} parent=0 // pred_region
    _
  $region5: #{double_conv.1} parent=0 // pred_fallthru
    _
  // Predicated region
  $region6: #{double_conv.1} parent=0 // pred_check
    _
  $region7: #{double_conv.1} parent=0 // pred_check_branch
    %17 = sbr.rel (0) target = $region9
  $region8: #{double_conv.1} parent=0 // pred_region
    _
  $region9: #{double_conv.1} parent=0 // pred_fallthru
    _
  // Predicated region
  $region10: #{double_conv.1} parent=0 // pred_check
    _
  $region11: #{double_conv.1} parent=0 // pred_check_branch
    %19 = sbr.rel (0) target = $region13
  $region12: #{double_conv.1} parent=0 // pred_region
    _
  $region13: #{double_conv.1} parent=0 // pred_fallthru
    _
  // Predicated region
  $region14: #{double_conv.1} parent=0 // pred_check
    _
  $region15: #{double_conv.1} parent=0 // pred_check_branch
    %21 = sbr.rel (0) target = $region17
  $region16: #{double_conv.1} parent=0 // pred_region
    _
  $region17: #{double_conv.1} parent=0 // pred_fallthru
    _
  // Predicated region
  $region18: #{double_conv.1} parent=0 // pred_check
    _
  $region19: #{double_conv.1} parent=0 // pred_check_branch
    %23 = sbr.rel (0) target = $region21
  $region20: #{double_conv.1} parent=0 // pred_region
    _
  $region21: #{double_conv.1} parent=0 // pred_fallthru
    _
  // Predicated region
  $region22: #{double_conv.1} parent=0 // pred_check
    _
  $region23: #{double_conv.1} parent=0 // pred_check_branch
    %25 = sbr.rel (0) target = $region25
  $region24: #{double_conv.1} parent=0 // pred_region
    _
  $region25: #{double_conv.1} parent=0 // pred_fallthru
    _
  // Predicated region
  $region26: #{double_conv.1} parent=0 // pred_check
    _
  $region27: #{double_conv.1} parent=0 // pred_check_branch
    %27 = sbr.rel (0) target = $region29
  $region28: #{double_conv.1} parent=0 // pred_region
    _
  $region29: #{double_conv.1} parent=0 // pred_fallthru
    _
  // Predicated region
  $region30: #{double_conv.1} parent=0 // pred_check
    _
  $region31: #{double_conv.1} parent=0 // pred_check_branch
    %29 = sbr.rel (0) target = $region33
  $region32: #{double_conv.1} parent=0 // pred_region
    _
  $region33: #{double_conv.1} parent=0 // pred_fallthru
    _
  // Predicated region
  $region34: #{double_conv.1} parent=0 // pred_check
    _
  $region35: #{double_conv.1} parent=0 // pred_check_branch
    %31 = sbr.rel (0) target = $region37
  $region36: #{double_conv.1} parent=0 // pred_region
    _
  $region37: #{double_conv.1} parent=0 // pred_fallthru
    _
  %v32 = vld [vmem:[%s0] sm:$0xff]
  %v33 = vld [vmem:[%s0 + $0x8] sm:$0xff]
  %v34 = vld [vmem:[%s0 + $0x10] sm:$0xff]
  %v35 = vld [vmem:[%s0 + $0x18] sm:$0xff]
  %v36 = vld [vmem:[%s8] sm:$0xff]
  %v37 = vld [vmem:[%s8 + $0x8] sm:$0xff]
  %v38 = vld [vmem:[%s8 + $0x10] sm:$0xff]
  %v39 = vld [vmem:[%s8 + $0x18] sm:$0xff]
  %v40 = vld [vmem:[%s8 + $0x20] sm:$0xff]
  %v41 = vld [vmem:[%s8 + $0x28] sm:$0xff]
  %v42 = vld [vmem:[%s8 + $0x30] sm:$0xff]
  %v43 = vld [vmem:[%s8 + $0x38] sm:$0xff]
  %v44 = vld [vmem:[%s8 + $0x40] sm:$0xff]
  %v45 = vld [vmem:[%s8 + $0x48] sm:$0xff]
  %v46 = vld [vmem:[%s8 + $0x50] sm:$0xff]
  %v47 = vld [vmem:[%s8 + $0x58] sm:$0xff]
  %v48 = vld [vmem:[%s8 + $0x60] sm:$0xff]
  %v49 = vld [vmem:[%s8 + $0x68] sm:$0xff]
  %v50 = vld [vmem:[%s8 + $0x70] sm:$0xff]
  %v51 = vld [vmem:[%s8 + $0x78] sm:$0xff]
  %v52 = vld [vmem:[%s3] sm:$0xff]
  %v53 = vld [vmem:[%s3 + $0x8] sm:$0xff]
  %v54 = vld [vmem:[%s3 + $0x10] sm:$0xff]
  %v55 = vld [vmem:[%s3 + $0x18] sm:$0xff]
  %v56 = vld [vmem:[%s4] sm:$0x1]
  %v57 = vld [vmem:[%s5] sm:$0x1]
  %v58 = vrot.slane %v32, 7
  %v59 = vrot.slane %v33, 7
  %v60 = vrot.slane %v34, 7
  %v61 = vrot.slane %v35, 7
  %v62 = vlaneseq
  %v63 = vshrl.u32 %v62, 7
  %vm64 = vcmp.lt.s32.totalorder %v63, 1
  %v65 = vsel %vm64, %v60, %v61
  %v66 = vsel %vm64, %v59, %v60
  %v67 = vsel %vm64, %v58, %v59
  %v68 = vsel %vm64, %v61, %v58
  %70 = vset.pattern.permute.xlu0 0
  %71 = vperm.xlu0 %70, %v52
  %v72 = vpop.permute.xlu0 %71
  %75 = vset.pattern.permute.xlu0 0
  %76 = vperm.xlu0 %75, %v53
  %v77 = vpop.permute.xlu0 %76
  %80 = vset.pattern.permute.xlu0 0
  %81 = vperm.xlu0 %80, %v54
  %v82 = vpop.permute.xlu0 %81
  %85 = vset.pattern.permute.xlu0 0
  %86 = vperm.xlu0 %85, %v55
  %v87 = vpop.permute.xlu0 %86
  %v89 = vmul.f32 %v68, %v72
  %v90 = vmul.f32 %v67, %v77
  %v91 = vmul.f32 %v66, %v82
  %v92 = vmul.f32 %v65, %v87
  %v93 = vrot.slane %v32, 1
  %v94 = vrot.slane %v33, 1
  %v95 = vrot.slane %v34, 1
  %v96 = vrot.slane %v35, 1
  %vm97 = vcmp.lt.s32.totalorder %v63, 7
  %v98 = vsel %vm97, %v95, %v96
  %v99 = vsel %vm97, %v94, %v95
  %v100 = vsel %vm97, %v93, %v94
  %v101 = vsel %vm97, %v96, %v93
  %102 = vset.pattern.permute.xlu0 1
  %103 = vperm.xlu0 %102, %v52
  %v104 = vpop.permute.xlu0 %103
  %106 = vset.pattern.permute.xlu0 1
  %107 = vperm.xlu0 %106, %v53
  %v108 = vpop.permute.xlu0 %107
  %110 = vset.pattern.permute.xlu0 1
  %111 = vperm.xlu0 %110, %v54
  %v112 = vpop.permute.xlu0 %111
  %114 = vset.pattern.permute.xlu0 1
  %115 = vperm.xlu0 %114, %v55
  %v116 = vpop.permute.xlu0 %115
  %v118 = vmul.f32 %v100, %v104
  %v119 = vmul.f32 %v99, %v108
  %v120 = vmul.f32 %v98, %v112
  %v121 = vmul.f32 %v101, %v116
  %vm122 = vcmask 523264
  %123 = vst.msk [vmem:[#allocation2] sm:$0xff] %vm122, %v89
  %124 = vst.msk [vmem:[#allocation2 + $0x10] sm:$0xff] %vm122, %v90
  %125 = vst.msk [vmem:[#allocation2 + $0x20] sm:$0xff] %vm122, %v91
  %126 = vst.msk [vmem:[#allocation2 + $0x30] sm:$0xff] %vm122, %v92
  %131 = vrot.lane.b32.xlu0 %v32, 64
  %v132 = vpop.permute.xlu0 %131
  %133 = vrot.lane.b32.xlu0 %v33, 64
  %v134 = vpop.permute.xlu0 %133
  %135 = vrot.lane.b32.xlu0 %v34, 64
  %v136 = vpop.permute.xlu0 %135
  %137 = vrot.lane.b32.xlu0 %v35, 64
  %v138 = vpop.permute.xlu0 %137
  %vm143 = vcmask 1048064
  %144 = vst.msk [vmem:[#allocation2] sm:$0xff] %vm143, %v132
  %145 = vst.msk [vmem:[#allocation2 + $0x10] sm:$0xff] %vm143, %v134
  %146 = vst.msk [vmem:[#allocation2 + $0x20] sm:$0xff] %vm143, %v136
  %147 = vst.msk [vmem:[#allocation2 + $0x30] sm:$0xff] %vm143, %v138
  %148 = vst.msk [vmem:[#allocation2 + $0x8] sm:$0xff] %vm122, %v118
  %149 = vst.msk [vmem:[#allocation2 + $0x18] sm:$0xff] %vm122, %v119
  %150 = vst.msk [vmem:[#allocation2 + $0x28] sm:$0xff] %vm122, %v120
  %151 = vst.msk [vmem:[#allocation2 + $0x38] sm:$0xff] %vm122, %v121
  %v152 = vld [vmem:[#allocation2] sm:$0xff]
  %v153 = vld [vmem:[#allocation2 + $0x8] sm:$0xff]
  %v154 = vld [vmem:[#allocation2 + $0x10] sm:$0xff]
  %v155 = vld [vmem:[#allocation2 + $0x18] sm:$0xff]
  %v156 = vld [vmem:[#allocation2 + $0x20] sm:$0xff]
  %v157 = vld [vmem:[#allocation2 + $0x28] sm:$0xff]
  %v158 = vld [vmem:[#allocation2 + $0x30] sm:$0xff]
  %v159 = vld [vmem:[#allocation2 + $0x38] sm:$0xff]
  %v160 = vld [vmem:[%s1] sm:$0xff]
  %v161 = vld [vmem:[%s1 + $0x8] sm:$0xff]
  %v162 = vld [vmem:[%s1 + $0x10] sm:$0xff]
  %v163 = vld [vmem:[%s1 + $0x18] sm:$0xff]
  %v164 = vld [vmem:[%s1 + $0x20] sm:$0xff]
  %v165 = vld [vmem:[%s1 + $0x28] sm:$0xff]
  %v166 = vld [vmem:[%s1 + $0x30] sm:$0xff]
  %v167 = vld [vmem:[%s1 + $0x38] sm:$0xff]
  %v168 = vld [vmem:[%s1 + $0x40] sm:$0xff]
  %v169 = vld [vmem:[%s1 + $0x48] sm:$0xff]
  %v170 = vld [vmem:[%s1 + $0x50] sm:$0xff]
  %v171 = vld [vmem:[%s1 + $0x58] sm:$0xff]
  %v172 = vld [vmem:[%s1 + $0x60] sm:$0xff]
  %v173 = vld [vmem:[%s1 + $0x68] sm:$0xff]
  %v174 = vld [vmem:[%s1 + $0x70] sm:$0xff]
  %v175 = vld [vmem:[%s1 + $0x78] sm:$0xff]
  %v176 = vld [vmem:[%s1 + $0x80] sm:$0xff]
  %v177 = vld [vmem:[%s1 + $0x88] sm:$0xff]
  %v178 = vld [vmem:[%s1 + $0x90] sm:$0xff]
  %v179 = vld [vmem:[%s1 + $0x98] sm:$0xff]
  %v180 = vld [vmem:[%s1 + $0xa0] sm:$0xff]
  %v181 = vld [vmem:[%s1 + $0xa8] sm:$0xff]
  %v182 = vld [vmem:[%s1 + $0xb0] sm:$0xff]
  %v183 = vld [vmem:[%s1 + $0xb8] sm:$0xff]
  %v185 = vsel %vm122, %v153, 0
  %v188 = vsel %vm122, %v155, 0
  %v191 = vsel %vm122, %v157, 0
  %v194 = vsel %vm122, %v159, 0
  %196 = vmatprep.subr.mxu0 0.0
  %197 = vmatpush1.msra.mxu0 %v160
  %198 = vmatprep.subr.mxu0 0.0
  %199 = vmatpush1.msra.mxu0 %v161
  %200 = vmatprep.subr.mxu0 0.0
  %201 = vmatpush1.msra.mxu0 %v162
  %202 = vmatprep.subr.mxu0 0.0
  %203 = vmatpush1.msra.mxu0 %v163
  %204 = vmatprep.subr.mxu0 0.0
  %205 = vmatpush1.msra.mxu0 %v164
  %206 = vmatprep.subr.mxu0 0.0
  %207 = vmatpush1.msra.mxu0 %v165
  %208 = vmatprep.subr.mxu0 0.0
  %209 = vmatpush1.msra.mxu0 %v166
  %210 = vmatprep.subr.mxu0 0.0
  %211 = vmatpush1.msra.mxu0 %v167
  %212 = vmatprep.subr.mxu0 0.0
  %213 = vmatpush1.msra.mxu0 %v168
  %214 = vmatprep.subr.mxu0 0.0
  %215 = vmatpush1.msra.mxu0 %v169
  %216 = vmatprep.subr.mxu0 0.0
  %217 = vmatpush1.msra.mxu0 %v170
  %218 = vmatprep.subr.mxu0 0.0
  %219 = vmatpush1.msra.mxu0 %v171
  %220 = vmatprep.subr.mxu0 0.0
  %221 = vmatpush1.msra.mxu0 %v172
  %222 = vmatprep.subr.mxu0 0.0
  %223 = vmatpush1.msra.mxu0 %v173
  %224 = vmatprep.subr.mxu0 0.0
  %225 = vmatpush1.msra.mxu0 %v174
  %226 = vmatprep.subr.mxu0 0.0
  %227 = vmatpush1.msra.mxu0 %v175
  %228 = vmatprep.subr.mxu0 0.0
  %229 = vmatpush1.msra.mxu0 %v176
  %230 = vmatprep.subr.mxu0 0.0
  %231 = vmatpush1.msra.mxu0 %v177
  %232 = vmatprep.subr.mxu0 0.0
  %233 = vmatpush1.msra.mxu0 %v178
  %234 = vmatprep.subr.mxu0 0.0
  %235 = vmatpush1.msra.mxu0 %v179
  %236 = vmatprep.subr.mxu0 0.0
  %237 = vmatpush1.msra.mxu0 %v180
  %238 = vmatprep.subr.mxu0 0.0
  %239 = vmatpush1.msra.mxu0 %v181
  %240 = vmatprep.subr.mxu0 0.0
  %241 = vmatpush1.msra.mxu0 %v182
  %242 = vmatprep.subr.mxu0 0.0
  %243 = vmatpush1.msra.mxu0 %v183
  %244 = vmatprep.subr.mxu0 0.0
  %245 = vmatpush1.msra.mxu0 0.0
  %246 = vmatprep.subr.mxu0 0.0
  %247 = vmatpush1.msra.mxu0 0.0
  %248 = vmatprep.subr.mxu0 0.0
  %249 = vmatpush1.msra.mxu0 0.0
  %250 = vmatprep.subr.mxu0 0.0
  %251 = vmatpush1.msra.mxu0 0.0
  %252 = vmatprep.subr.mxu0 0.0
  %253 = vmatpush1.msra.mxu0 0.0
  %254 = vmatprep.subr.mxu0 0.0
  %255 = vmatpush1.msra.mxu0 0.0
  %256 = vmatprep.subr.mxu0 0.0
  %257 = vmatpush1.msra.mxu0 0.0
  %258 = vmatprep.subr.mxu0 0.0
  %259 = vmatpush1.msra.mxu0 0.0
  %260 = vmatprep.mubr.f32.mxu0 %v185
  %261 = vmatmul.mubr.f32.gmra.mrb[0].mxu0 %v152
  %v262 = vpop.f32.mrb[0].mxu0
  %v263 = vadd.f32 0.0, %v262
  %v264 = vpop.f32.mrb[0].mxu0
  %265 = vmatprep.mubr.f32.mxu0 %v188
  %266 = vmatmul.mubr.f32.gmra.mrb[0].mxu0 %v154
  %v267 = vpop.f32.mrb[0].mxu0
  %v268 = vadd.f32 0.0, %v267
  %v269 = vpop.f32.mrb[0].mxu0
  %270 = vmatprep.mubr.f32.mxu0 %v191
  %271 = vmatmul.mubr.f32.gmra.mrb[0].mxu0 %v156
  %v272 = vpop.f32.mrb[0].mxu0
  %v273 = vadd.f32 0.0, %v272
  %v274 = vpop.f32.mrb[0].mxu0
  %275 = vmatprep.mubr.f32.mxu0 %v194
  %276 = vmatmul.mubr.f32.gmra.mrb[0].mxu0 %v158
  %v277 = vpop.f32.mrb[0].mxu0
  %v278 = vadd.f32 0.0, %v277
  %v279 = vpop.f32.mrb[0].mxu0
  %280 = vdwg.mxu0
  %v281 = vadd.f32 %v263, %v268
  %v282 = vadd.f32 %v281, %v273
  %v283 = vadd.f32 %v282, %v278
  %v284 = vrot.slane %v283, 4
  %v285 = vadd.f32 %v283, %v284
  %v286 = vrot.slane %v285, 2
  %v287 = vadd.f32 %v285, %v286
  %v288 = vrot.slane %v287, 1
  %v289 = vadd.f32 %v287, %v288
  %v290 = vmul.f32 %v263, %v263
  %v291 = vmul.f32 %v268, %v268
  %v292 = vmul.f32 %v273, %v273
  %v293 = vmul.f32 %v278, %v278
  %v294 = vadd.f32 %v290, %v291
  %v295 = vadd.f32 %v294, %v292
  %v296 = vadd.f32 %v295, %v293
  %v297 = vrot.slane %v296, 4
  %v298 = vadd.f32 %v296, %v297
  %v299 = vrot.slane %v298, 2
  %v300 = vadd.f32 %v298, %v299
  %v301 = vrot.slane %v300, 1
  %v302 = vadd.f32 %v300, %v301
  %303 = vmatprep.subr.mxu0 0.0
  %304 = vmatpush1.msra.mxu0 %v36
  %305 = vmatprep.subr.mxu0 0.0
  %306 = vmatpush1.msra.mxu0 %v37
  %307 = vmatprep.subr.mxu0 0.0
  %308 = vmatpush1.msra.mxu0 %v38
  %309 = vmatprep.subr.mxu0 0.0
  %310 = vmatpush1.msra.mxu0 %v39
  %311 = vmatprep.subr.mxu0 0.0
  %312 = vmatpush1.msra.mxu0 %v40
  %313 = vmatprep.subr.mxu0 0.0
  %314 = vmatpush1.msra.mxu0 %v41
  %315 = vmatprep.subr.mxu0 0.0
  %316 = vmatpush1.msra.mxu0 %v42
  %317 = vmatprep.subr.mxu0 0.0
  %318 = vmatpush1.msra.mxu0 %v43
  %319 = vmatprep.subr.mxu0 0.0
  %320 = vmatpush1.msra.mxu0 %v44
  %321 = vmatprep.subr.mxu0 0.0
  %322 = vmatpush1.msra.mxu0 %v45
  %323 = vmatprep.subr.mxu0 0.0
  %324 = vmatpush1.msra.mxu0 %v46
  %325 = vmatprep.subr.mxu0 0.0
  %326 = vmatpush1.msra.mxu0 %v47
  %327 = vmatprep.subr.mxu0 0.0
  %328 = vmatpush1.msra.mxu0 %v48
  %329 = vmatprep.subr.mxu0 0.0
  %330 = vmatpush1.msra.mxu0 %v49
  %331 = vmatprep.subr.mxu0 0.0
  %332 = vmatpush1.msra.mxu0 %v50
  %333 = vmatprep.subr.mxu0 0.0
  %334 = vmatpush1.msra.mxu0 %v51
  %335 = vmatprep.subr.mxu0 0.0
  %336 = vmatpush1.msra.mxu0 0.0
  %337 = vmatprep.subr.mxu0 0.0
  %338 = vmatpush1.msra.mxu0 0.0
  %339 = vmatprep.subr.mxu0 0.0
  %340 = vmatpush1.msra.mxu0 0.0
  %341 = vmatprep.subr.mxu0 0.0
  %342 = vmatpush1.msra.mxu0 0.0
  %343 = vmatprep.subr.mxu0 0.0
  %344 = vmatpush1.msra.mxu0 0.0
  %345 = vmatprep.subr.mxu0 0.0
  %346 = vmatpush1.msra.mxu0 0.0
  %347 = vmatprep.subr.mxu0 0.0
  %348 = vmatpush1.msra.mxu0 0.0
  %349 = vmatprep.subr.mxu0 0.0
  %350 = vmatpush1.msra.mxu0 0.0
  %351 = vmatprep.subr.mxu0 0.0
  %352 = vmatpush1.msra.mxu0 0.0
  %353 = vmatprep.subr.mxu0 0.0
  %354 = vmatpush1.msra.mxu0 0.0
  %355 = vmatprep.subr.mxu0 0.0
  %356 = vmatpush1.msra.mxu0 0.0
  %357 = vmatprep.subr.mxu0 0.0
  %358 = vmatpush1.msra.mxu0 0.0
  %359 = vmatprep.subr.mxu0 0.0
  %360 = vmatpush1.msra.mxu0 0.0
  %361 = vmatprep.subr.mxu0 0.0
  %362 = vmatpush1.msra.mxu0 0.0
  %363 = vmatprep.subr.mxu0 0.0
  %364 = vmatpush1.msra.mxu0 0.0
  %365 = vmatprep.subr.mxu0 0.0
  %366 = vmatpush1.msra.mxu0 0.0
  %367 = vmatprep.mubr.f32.mxu0 0.0
  %368 = vmatmul.mubr.f32.gmra.mrb[0].mxu0 %v289
  %v369 = vpop.f32.mrb[0].mxu0
  %v370 = vadd.f32 0.0, %v369
  %v371 = vpop.f32.mrb[0].mxu0
  %372 = vdwg.mxu0
  %v373 = vmul.f32 %v370, 0.001953125
  %374 = vmatprep.subr.mxu0 0.0
  %375 = vmatpush1.msra.mxu0 %v36
  %376 = vmatprep.subr.mxu0 0.0
  %377 = vmatpush1.msra.mxu0 %v37
  %378 = vmatprep.subr.mxu0 0.0
  %379 = vmatpush1.msra.mxu0 %v38
  %380 = vmatprep.subr.mxu0 0.0
  %381 = vmatpush1.msra.mxu0 %v39
  %382 = vmatprep.subr.mxu0 0.0
  %383 = vmatpush1.msra.mxu0 %v40
  %384 = vmatprep.subr.mxu0 0.0
  %385 = vmatpush1.msra.mxu0 %v41
  %386 = vmatprep.subr.mxu0 0.0
  %387 = vmatpush1.msra.mxu0 %v42
  %388 = vmatprep.subr.mxu0 0.0
  %389 = vmatpush1.msra.mxu0 %v43
  %390 = vmatprep.subr.mxu0 0.0
  %391 = vmatpush1.msra.mxu0 %v44
  %392 = vmatprep.subr.mxu0 0.0
  %393 = vmatpush1.msra.mxu0 %v45
  %394 = vmatprep.subr.mxu0 0.0
  %395 = vmatpush1.msra.mxu0 %v46
  %396 = vmatprep.subr.mxu0 0.0
  %397 = vmatpush1.msra.mxu0 %v47
  %398 = vmatprep.subr.mxu0 0.0
  %399 = vmatpush1.msra.mxu0 %v48
  %400 = vmatprep.subr.mxu0 0.0
  %401 = vmatpush1.msra.mxu0 %v49
  %402 = vmatprep.subr.mxu0 0.0
  %403 = vmatpush1.msra.mxu0 %v50
  %404 = vmatprep.subr.mxu0 0.0
  %405 = vmatpush1.msra.mxu0 %v51
  %406 = vmatprep.subr.mxu0 0.0
  %407 = vmatpush1.msra.mxu0 0.0
  %408 = vmatprep.subr.mxu0 0.0
  %409 = vmatpush1.msra.mxu0 0.0
  %410 = vmatprep.subr.mxu0 0.0
  %411 = vmatpush1.msra.mxu0 0.0
  %412 = vmatprep.subr.mxu0 0.0
  %413 = vmatpush1.msra.mxu0 0.0
  %414 = vmatprep.subr.mxu0 0.0
  %415 = vmatpush1.msra.mxu0 0.0
  %416 = vmatprep.subr.mxu0 0.0
  %417 = vmatpush1.msra.mxu0 0.0
  %418 = vmatprep.subr.mxu0 0.0
  %419 = vmatpush1.msra.mxu0 0.0
  %420 = vmatprep.subr.mxu0 0.0
  %421 = vmatpush1.msra.mxu0 0.0
  %422 = vmatprep.subr.mxu0 0.0
  %423 = vmatpush1.msra.mxu0 0.0
  %424 = vmatprep.subr.mxu0 0.0
  %425 = vmatpush1.msra.mxu0 0.0
  %426 = vmatprep.subr.mxu0 0.0
  %427 = vmatpush1.msra.mxu0 0.0
  %428 = vmatprep.subr.mxu0 0.0
  %429 = vmatpush1.msra.mxu0 0.0
  %430 = vmatprep.subr.mxu0 0.0
  %431 = vmatpush1.msra.mxu0 0.0
  %432 = vmatprep.subr.mxu0 0.0
  %433 = vmatpush1.msra.mxu0 0.0
  %434 = vmatprep.subr.mxu0 0.0
  %435 = vmatpush1.msra.mxu0 0.0
  %436 = vmatprep.subr.mxu0 0.0
  %437 = vmatpush1.msra.mxu0 0.0
  %438 = vmatprep.mubr.f32.mxu0 0.0
  %439 = vmatmul.mubr.f32.gmra.mrb[0].mxu0 %v302
  %v440 = vpop.f32.mrb[0].mxu0
  %v441 = vadd.f32 0.0, %v440
  %v442 = vpop.f32.mrb[0].mxu0
  %443 = vdwg.mxu0
  %v444 = vmul.f32 %v441, 0.001953125
  %v445 = vmul.f32 %v373, %v373
  %v446 = vsub.f32 %v444, %v445
  %v447 = vadd.f32 %v446, 1e-05
  %v448 = vrsqrt.pop %v447
  %v449 = vmul.f32 %v56, %v448
  %v450 = vmul.f32 %v373, %v449
  %v451 = vsub.f32 %v57, %v450
  %v453 = vlaneseq
  %v454 = vshrl.u32 %v453, 7
  %v455 = vsub.s32 0, %v454
  %v456 = vrot.slane %v449, %v455
  %v458 = vmul.f32 %v263, %v456
  %v459 = vmul.f32 %v268, %v456
  %v460 = vmul.f32 %v273, %v456
  %v461 = vmul.f32 %v278, %v456
  %v463 = vlaneseq
  %v464 = vshrl.u32 %v463, 7
  %v465 = vsub.s32 0, %v464
  %v466 = vrot.slane %v451, %v465
  %v468 = vadd.f32 %v458, %v466
  %v469 = vadd.f32 %v459, %v466
  %v470 = vadd.f32 %v460, %v466
  %v471 = vadd.f32 %v461, %v466
  %v472 = vmax.f32 %v468, 0.0
  %v473 = vmax.f32 %v469, 0.0
  %v474 = vmax.f32 %v470, 0.0
  %v475 = vmax.f32 %v471, 0.0
  %v476 = vld [vmem:[%s6] sm:$0x1]
  %v477 = vld [vmem:[%s7] sm:$0x1]
  %v478 = vrot.slane %v472, 7
  %v479 = vrot.slane %v473, 7
  %v480 = vrot.slane %v474, 7
  %v481 = vrot.slane %v475, 7
  %v482 = vsel %vm64, %v480, %v481
  %v483 = vsel %vm64, %v479, %v480
  %v484 = vsel %vm64, %v478, %v479
  %v485 = vsel %vm64, %v481, %v478
  %v486 = vmul.f32 %v485, %v72
  %v487 = vmul.f32 %v484, %v77
  %v488 = vmul.f32 %v483, %v82
  %v489 = vmul.f32 %v482, %v87
  %v490 = vrot.slane %v472, 1
  %v491 = vrot.slane %v473, 1
  %v492 = vrot.slane %v474, 1
  %v493 = vrot.slane %v475, 1
  %v494 = vsel %vm97, %v492, %v493
  %v495 = vsel %vm97, %v491, %v492
  %v496 = vsel %vm97, %v490, %v491
  %v497 = vsel %vm97, %v493, %v490
  %v498 = vmul.f32 %v496, %v104
  %v499 = vmul.f32 %v495, %v108
  %v500 = vmul.f32 %v494, %v112
  %v501 = vmul.f32 %v497, %v116
  %502 = vst [vmem:[#allocation3] sm:$0xff] %v486
  %503 = vst [vmem:[#allocation3 + $0x18] sm:$0xff] %v487
  %504 = vst [vmem:[#allocation3 + $0x30] sm:$0xff] %v488
  %505 = vst [vmem:[#allocation3 + $0x48] sm:$0xff] %v489
  %506 = vst [vmem:[#allocation3 + $0x8] sm:$0xff] %v472
  %507 = vst [vmem:[#allocation3 + $0x20] sm:$0xff] %v473
  %508 = vst [vmem:[#allocation3 + $0x38] sm:$0xff] %v474
  %509 = vst [vmem:[#allocation3 + $0x50] sm:$0xff] %v475
  %510 = vst [vmem:[#allocation3 + $0x10] sm:$0xff] %v498
  %511 = vst [vmem:[#allocation3 + $0x28] sm:$0xff] %v499
  %512 = vst [vmem:[#allocation3 + $0x40] sm:$0xff] %v500
  %513 = vst [vmem:[#allocation3 + $0x58] sm:$0xff] %v501
  %v514 = vld [vmem:[#allocation3] sm:$0xff]
  %v515 = vld [vmem:[#allocation3 + $0x8] sm:$0xff]
  %v516 = vld [vmem:[#allocation3 + $0x10] sm:$0xff]
  %v517 = vld [vmem:[#allocation3 + $0x18] sm:$0xff]
  %v518 = vld [vmem:[#allocation3 + $0x20] sm:$0xff]
  %v519 = vld [vmem:[#allocation3 + $0x28] sm:$0xff]
  %v520 = vld [vmem:[#allocation3 + $0x30] sm:$0xff]
  %v521 = vld [vmem:[#allocation3 + $0x38] sm:$0xff]
  %v522 = vld [vmem:[#allocation3 + $0x40] sm:$0xff]
  %v523 = vld [vmem:[#allocation3 + $0x48] sm:$0xff]
  %v524 = vld [vmem:[#allocation3 + $0x50] sm:$0xff]
  %v525 = vld [vmem:[#allocation3 + $0x58] sm:$0xff]
  %v526 = vld [vmem:[%s2] sm:$0xff]
  %v527 = vld [vmem:[%s2 + $0x8] sm:$0xff]
  %v528 = vld [vmem:[%s2 + $0x10] sm:$0xff]
  %v529 = vld [vmem:[%s2 + $0x18] sm:$0xff]
  %v530 = vld [vmem:[%s2 + $0x20] sm:$0xff]
  %v531 = vld [vmem:[%s2 + $0x28] sm:$0xff]
  %v532 = vld [vmem:[%s2 + $0x30] sm:$0xff]
  %v533 = vld [vmem:[%s2 + $0x38] sm:$0xff]
  %v534 = vld [vmem:[%s2 + $0x40] sm:$0xff]
  %v535 = vld [vmem:[%s2 + $0x48] sm:$0xff]
  %v536 = vld [vmem:[%s2 + $0x50] sm:$0xff]
  %v537 = vld [vmem:[%s2 + $0x58] sm:$0xff]
  %v538 = vld [vmem:[%s2 + $0x60] sm:$0xff]
  %v539 = vld [vmem:[%s2 + $0x68] sm:$0xff]
  %v540 = vld [vmem:[%s2 + $0x70] sm:$0xff]
  %v541 = vld [vmem:[%s2 + $0x78] sm:$0xff]
  %v542 = vld [vmem:[%s2 + $0x80] sm:$0xff]
  %v543 = vld [vmem:[%s2 + $0x88] sm:$0xff]
  %v544 = vld [vmem:[%s2 + $0x90] sm:$0xff]
  %v545 = vld [vmem:[%s2 + $0x98] sm:$0xff]
  %v546 = vld [vmem:[%s2 + $0xa0] sm:$0xff]
  %v547 = vld [vmem:[%s2 + $0xa8] sm:$0xff]
  %v548 = vld [vmem:[%s2 + $0xb0] sm:$0xff]
  %v549 = vld [vmem:[%s2 + $0xb8] sm:$0xff]
  %v550 = vld [vmem:[%s2 + $0xc0] sm:$0xff]
  %v551 = vld [vmem:[%s2 + $0xc8] sm:$0xff]
  %v552 = vld [vmem:[%s2 + $0xd0] sm:$0xff]
  %v553 = vld [vmem:[%s2 + $0xd8] sm:$0xff]
  %v554 = vld [vmem:[%s2 + $0xe0] sm:$0xff]
  %v555 = vld [vmem:[%s2 + $0xe8] sm:$0xff]
  %v556 = vld [vmem:[%s2 + $0xf0] sm:$0xff]
  %v557 = vld [vmem:[%s2 + $0xf8] sm:$0xff]
  %v558 = vld [vmem:[%s2 + $0x100] sm:$0xff]
  %v559 = vld [vmem:[%s2 + $0x108] sm:$0xff]
  %v560 = vld [vmem:[%s2 + $0x110] sm:$0xff]
  %v561 = vld [vmem:[%s2 + $0x118] sm:$0xff]
  %v562 = vld [vmem:[%s2 + $0x120] sm:$0xff]
  %v563 = vld [vmem:[%s2 + $0x128] sm:$0xff]
  %v564 = vld [vmem:[%s2 + $0x130] sm:$0xff]
  %v565 = vld [vmem:[%s2 + $0x138] sm:$0xff]
  %v566 = vld [vmem:[%s2 + $0x140] sm:$0xff]
  %v567 = vld [vmem:[%s2 + $0x148] sm:$0xff]
  %v568 = vld [vmem:[%s2 + $0x150] sm:$0xff]
  %v569 = vld [vmem:[%s2 + $0x158] sm:$0xff]
  %v570 = vld [vmem:[%s2 + $0x160] sm:$0xff]
  %v571 = vld [vmem:[%s2 + $0x168] sm:$0xff]
  %v572 = vld [vmem:[%s2 + $0x170] sm:$0xff]
  %v573 = vld [vmem:[%s2 + $0x178] sm:$0xff]
  %574 = vmatprep.subr.mxu0 0.0
  %575 = vmatpush1.msra.mxu0 %v526
  %576 = vmatprep.subr.mxu0 0.0
  %577 = vmatpush1.msra.mxu0 %v527
  %578 = vmatprep.subr.mxu0 0.0
  %579 = vmatpush1.msra.mxu0 %v528
  %580 = vmatprep.subr.mxu0 0.0
  %581 = vmatpush1.msra.mxu0 %v529
  %582 = vmatprep.subr.mxu0 0.0
  %583 = vmatpush1.msra.mxu0 %v530
  %584 = vmatprep.subr.mxu0 0.0
  %585 = vmatpush1.msra.mxu0 %v531
  %586 = vmatprep.subr.mxu0 0.0
  %587 = vmatpush1.msra.mxu0 %v532
  %588 = vmatprep.subr.mxu0 0.0
  %589 = vmatpush1.msra.mxu0 %v533
  %590 = vmatprep.subr.mxu0 0.0
  %591 = vmatpush1.msra.mxu0 %v534
  %592 = vmatprep.subr.mxu0 0.0
  %593 = vmatpush1.msra.mxu0 %v535
  %594 = vmatprep.subr.mxu0 0.0
  %595 = vmatpush1.msra.mxu0 %v536
  %596 = vmatprep.subr.mxu0 0.0
  %597 = vmatpush1.msra.mxu0 %v537
  %598 = vmatprep.subr.mxu0 0.0
  %599 = vmatpush1.msra.mxu0 %v538
  %600 = vmatprep.subr.mxu0 0.0
  %601 = vmatpush1.msra.mxu0 %v539
  %602 = vmatprep.subr.mxu0 0.0
  %603 = vmatpush1.msra.mxu0 %v540
  %604 = vmatprep.subr.mxu0 0.0
  %605 = vmatpush1.msra.mxu0 %v541
  %606 = vmatprep.subr.mxu0 0.0
  %607 = vmatpush1.msra.mxu0 %v542
  %608 = vmatprep.subr.mxu0 0.0
  %609 = vmatpush1.msra.mxu0 %v543
  %610 = vmatprep.subr.mxu0 0.0
  %611 = vmatpush1.msra.mxu0 %v544
  %612 = vmatprep.subr.mxu0 0.0
  %613 = vmatpush1.msra.mxu0 %v545
  %614 = vmatprep.subr.mxu0 0.0
  %615 = vmatpush1.msra.mxu0 %v546
  %616 = vmatprep.subr.mxu0 0.0
  %617 = vmatpush1.msra.mxu0 %v547
  %618 = vmatprep.subr.mxu0 0.0
  %619 = vmatpush1.msra.mxu0 %v548
  %620 = vmatprep.subr.mxu0 0.0
  %621 = vmatpush1.msra.mxu0 %v549
  %622 = vmatprep.subr.mxu0 0.0
  %623 = vmatpush1.msra.mxu0 %v550
  %624 = vmatprep.subr.mxu0 0.0
  %625 = vmatpush1.msra.mxu0 %v551
  %626 = vmatprep.subr.mxu0 0.0
  %627 = vmatpush1.msra.mxu0 %v552
  %628 = vmatprep.subr.mxu0 0.0
  %629 = vmatpush1.msra.mxu0 %v553
  %630 = vmatprep.subr.mxu0 0.0
  %631 = vmatpush1.msra.mxu0 %v554
  %632 = vmatprep.subr.mxu0 0.0
  %633 = vmatpush1.msra.mxu0 %v555
  %634 = vmatprep.subr.mxu0 0.0
  %635 = vmatpush1.msra.mxu0 %v556
  %636 = vmatprep.subr.mxu0 0.0
  %637 = vmatpush1.msra.mxu0 %v557
  %638 = vmatprep.mubr.f32.mxu0 %v515
  %639 = vmatmul.mubr.f32.gmra.mrb[0].mxu0 %v514
  %v640 = vpop.f32.mrb[0].mxu0
  %v641 = vadd.f32 0.0, %v640
  %v642 = vpop.f32.mrb[0].mxu0
  %643 = vmatprep.mubr.f32.mxu0 %v518
  %644 = vmatmul.mubr.f32.gmra.mrb[0].mxu0 %v517
  %v645 = vpop.f32.mrb[0].mxu0
  %v646 = vadd.f32 0.0, %v645
  %v647 = vpop.f32.mrb[0].mxu0
  %648 = vmatprep.mubr.f32.mxu0 %v521
  %649 = vmatmul.mubr.f32.gmra.mrb[0].mxu0 %v520
  %v650 = vpop.f32.mrb[0].mxu0
  %v651 = vadd.f32 0.0, %v650
  %v652 = vpop.f32.mrb[0].mxu0
  %653 = vmatprep.mubr.f32.mxu0 %v524
  %654 = vmatmul.mubr.f32.gmra.mrb[0].mxu0 %v523
  %v655 = vpop.f32.mrb[0].mxu0
  %v656 = vadd.f32 0.0, %v655
  %v657 = vpop.f32.mrb[0].mxu0
  %658 = vdwg.mxu0
  %659 = vmatprep.subr.mxu0 0.0
  %660 = vmatpush1.msra.mxu0 %v558
  %661 = vmatprep.subr.mxu0 0.0
  %662 = vmatpush1.msra.mxu0 %v559
  %663 = vmatprep.subr.mxu0 0.0
  %664 = vmatpush1.msra.mxu0 %v560
  %665 = vmatprep.subr.mxu0 0.0
  %666 = vmatpush1.msra.mxu0 %v561
  %667 = vmatprep.subr.mxu0 0.0
  %668 = vmatpush1.msra.mxu0 %v562
  %669 = vmatprep.subr.mxu0 0.0
  %670 = vmatpush1.msra.mxu0 %v563
  %671 = vmatprep.subr.mxu0 0.0
  %672 = vmatpush1.msra.mxu0 %v564
  %673 = vmatprep.subr.mxu0 0.0
  %674 = vmatpush1.msra.mxu0 %v565
  %675 = vmatprep.subr.mxu0 0.0
  %676 = vmatpush1.msra.mxu0 %v566
  %677 = vmatprep.subr.mxu0 0.0
  %678 = vmatpush1.msra.mxu0 %v567
  %679 = vmatprep.subr.mxu0 0.0
  %680 = vmatpush1.msra.mxu0 %v568
  %681 = vmatprep.subr.mxu0 0.0
  %682 = vmatpush1.msra.mxu0 %v569
  %683 = vmatprep.subr.mxu0 0.0
  %684 = vmatpush1.msra.mxu0 %v570
  %685 = vmatprep.subr.mxu0 0.0
  %686 = vmatpush1.msra.mxu0 %v571
  %687 = vmatprep.subr.mxu0 0.0
  %688 = vmatpush1.msra.mxu0 %v572
  %689 = vmatprep.subr.mxu0 0.0
  %690 = vmatpush1.msra.mxu0 %v573
  %691 = vmatprep.subr.mxu0 0.0
  %692 = vmatpush1.msra.mxu0 0.0
  %693 = vmatprep.subr.mxu0 0.0
  %694 = vmatpush1.msra.mxu0 0.0
  %695 = vmatprep.subr.mxu0 0.0
  %696 = vmatpush1.msra.mxu0 0.0
  %697 = vmatprep.subr.mxu0 0.0
  %698 = vmatpush1.msra.mxu0 0.0
  %699 = vmatprep.subr.mxu0 0.0
  %700 = vmatpush1.msra.mxu0 0.0
  %701 = vmatprep.subr.mxu0 0.0
  %702 = vmatpush1.msra.mxu0 0.0
  %703 = vmatprep.subr.mxu0 0.0
  %704 = vmatpush1.msra.mxu0 0.0
  %705 = vmatprep.subr.mxu0 0.0
  %706 = vmatpush1.msra.mxu0 0.0
  %707 = vmatprep.subr.mxu0 0.0
  %708 = vmatpush1.msra.mxu0 0.0
  %709 = vmatprep.subr.mxu0 0.0
  %710 = vmatpush1.msra.mxu0 0.0
  %711 = vmatprep.subr.mxu0 0.0
  %712 = vmatpush1.msra.mxu0 0.0
  %713 = vmatprep.subr.mxu0 0.0
  %714 = vmatpush1.msra.mxu0 0.0
  %715 = vmatprep.subr.mxu0 0.0
  %716 = vmatpush1.msra.mxu0 0.0
  %717 = vmatprep.subr.mxu0 0.0
  %718 = vmatpush1.msra.mxu0 0.0
  %719 = vmatprep.subr.mxu0 0.0
  %720 = vmatpush1.msra.mxu0 0.0
  %721 = vmatprep.subr.mxu0 0.0
  %722 = vmatpush1.msra.mxu0 0.0
  %723 = vmatprep.mubr.f32.mxu0 0.0
  %724 = vmatmul.mubr.f32.gmra.mrb[0].mxu0 %v516
  %v725 = vpop.f32.mrb[0].mxu0
  %v726 = vadd.f32 %v641, %v725
  %v727 = vpop.f32.mrb[0].mxu0
  %728 = vmatprep.mubr.f32.mxu0 0.0
  %729 = vmatmul.mubr.f32.gmra.mrb[0].mxu0 %v519
  %v730 = vpop.f32.mrb[0].mxu0
  %v731 = vadd.f32 %v646, %v730
  %v732 = vpop.f32.mrb[0].mxu0
  %733 = vmatprep.mubr.f32.mxu0 0.0
  %734 = vmatmul.mubr.f32.gmra.mrb[0].mxu0 %v522
  %v735 = vpop.f32.mrb[0].mxu0
  %v736 = vadd.f32 %v651, %v735
  %v737 = vpop.f32.mrb[0].mxu0
  %738 = vmatprep.mubr.f32.mxu0 0.0
  %739 = vmatmul.mubr.f32.gmra.mrb[0].mxu0 %v525
  %v740 = vpop.f32.mrb[0].mxu0
  %v741 = vadd.f32 %v656, %v740
  %v742 = vpop.f32.mrb[0].mxu0
  %743 = vdwg.mxu0
  %v744 = vadd.f32 %v726, %v731
  %v745 = vadd.f32 %v744, %v736
  %v746 = vadd.f32 %v745, %v741
  %v747 = vrot.slane %v746, 4
  %v748 = vadd.f32 %v746, %v747
  %v749 = vrot.slane %v748, 2
  %v750 = vadd.f32 %v748, %v749
  %v751 = vrot.slane %v750, 1
  %v752 = vadd.f32 %v750, %v751
  %v753 = vmul.f32 %v726, %v726
  %v754 = vmul.f32 %v731, %v731
  %v755 = vmul.f32 %v736, %v736
  %v756 = vmul.f32 %v741, %v741
  %v757 = vadd.f32 %v753, %v754
  %v758 = vadd.f32 %v757, %v755
  %v759 = vadd.f32 %v758, %v756
  %v760 = vrot.slane %v759, 4
  %v761 = vadd.f32 %v759, %v760
  %v762 = vrot.slane %v761, 2
  %v763 = vadd.f32 %v761, %v762
  %v764 = vrot.slane %v763, 1
  %v765 = vadd.f32 %v763, %v764
  %766 = vmatprep.subr.mxu0 0.0
  %767 = vmatpush1.msra.mxu0 %v36
  %768 = vmatprep.subr.mxu0 0.0
  %769 = vmatpush1.msra.mxu0 %v37
  %770 = vmatprep.subr.mxu0 0.0
  %771 = vmatpush1.msra.mxu0 %v38
  %772 = vmatprep.subr.mxu0 0.0
  %773 = vmatpush1.msra.mxu0 %v39
  %774 = vmatprep.subr.mxu0 0.0
  %775 = vmatpush1.msra.mxu0 %v40
  %776 = vmatprep.subr.mxu0 0.0
  %777 = vmatpush1.msra.mxu0 %v41
  %778 = vmatprep.subr.mxu0 0.0
  %779 = vmatpush1.msra.mxu0 %v42
  %780 = vmatprep.subr.mxu0 0.0
  %781 = vmatpush1.msra.mxu0 %v43
  %782 = vmatprep.subr.mxu0 0.0
  %783 = vmatpush1.msra.mxu0 %v44
  %784 = vmatprep.subr.mxu0 0.0
  %785 = vmatpush1.msra.mxu0 %v45
  %786 = vmatprep.subr.mxu0 0.0
  %787 = vmatpush1.msra.mxu0 %v46
  %788 = vmatprep.subr.mxu0 0.0
  %789 = vmatpush1.msra.mxu0 %v47
  %790 = vmatprep.subr.mxu0 0.0
  %791 = vmatpush1.msra.mxu0 %v48
  %792 = vmatprep.subr.mxu0 0.0
  %793 = vmatpush1.msra.mxu0 %v49
  %794 = vmatprep.subr.mxu0 0.0
  %795 = vmatpush1.msra.mxu0 %v50
  %796 = vmatprep.subr.mxu0 0.0
  %797 = vmatpush1.msra.mxu0 %v51
  %798 = vmatprep.subr.mxu0 0.0
  %799 = vmatpush1.msra.mxu0 0.0
  %800 = vmatprep.subr.mxu0 0.0
  %801 = vmatpush1.msra.mxu0 0.0
  %802 = vmatprep.subr.mxu0 0.0
  %803 = vmatpush1.msra.mxu0 0.0
  %804 = vmatprep.subr.mxu0 0.0
  %805 = vmatpush1.msra.mxu0 0.0
  %806 = vmatprep.subr.mxu0 0.0
  %807 = vmatpush1.msra.mxu0 0.0
  %808 = vmatprep.subr.mxu0 0.0
  %809 = vmatpush1.msra.mxu0 0.0
  %810 = vmatprep.subr.mxu0 0.0
  %811 = vmatpush1.msra.mxu0 0.0
  %812 = vmatprep.subr.mxu0 0.0
  %813 = vmatpush1.msra.mxu0 0.0
  %814 = vmatprep.subr.mxu0 0.0
  %815 = vmatpush1.msra.mxu0 0.0
  %816 = vmatprep.subr.mxu0 0.0
  %817 = vmatpush1.msra.mxu0 0.0
  %818 = vmatprep.subr.mxu0 0.0
  %819 = vmatpush1.msra.mxu0 0.0
  %820 = vmatprep.subr.mxu0 0.0
  %821 = vmatpush1.msra.mxu0 0.0
  %822 = vmatprep.subr.mxu0 0.0
  %823 = vmatpush1.msra.mxu0 0.0
  %824 = vmatprep.subr.mxu0 0.0
  %825 = vmatpush1.msra.mxu0 0.0
  %826 = vmatprep.subr.mxu0 0.0
  %827 = vmatpush1.msra.mxu0 0.0
  %828 = vmatprep.subr.mxu0 0.0
  %829 = vmatpush1.msra.mxu0 0.0
  %830 = vmatprep.mubr.f32.mxu0 0.0
  %831 = vmatmul.mubr.f32.gmra.mrb[0].mxu0 %v752
  %v832 = vpop.f32.mrb[0].mxu0
  %v833 = vadd.f32 0.0, %v832
  %v834 = vpop.f32.mrb[0].mxu0
  %835 = vdwg.mxu0
  %v836 = vmul.f32 %v833, 0.001953125
  %837 = vmatprep.subr.mxu0 0.0
  %838 = vmatpush1.msra.mxu0 %v36
  %839 = vmatprep.subr.mxu0 0.0
  %840 = vmatpush1.msra.mxu0 %v37
  %841 = vmatprep.subr.mxu0 0.0
  %842 = vmatpush1.msra.mxu0 %v38
  %843 = vmatprep.subr.mxu0 0.0
  %844 = vmatpush1.msra.mxu0 %v39
  %845 = vmatprep.subr.mxu0 0.0
  %846 = vmatpush1.msra.mxu0 %v40
  %847 = vmatprep.subr.mxu0 0.0
  %848 = vmatpush1.msra.mxu0 %v41
  %849 = vmatprep.subr.mxu0 0.0
  %850 = vmatpush1.msra.mxu0 %v42
  %851 = vmatprep.subr.mxu0 0.0
  %852 = vmatpush1.msra.mxu0 %v43
  %853 = vmatprep.subr.mxu0 0.0
  %854 = vmatpush1.msra.mxu0 %v44
  %855 = vmatprep.subr.mxu0 0.0
  %856 = vmatpush1.msra.mxu0 %v45
  %857 = vmatprep.subr.mxu0 0.0
  %858 = vmatpush1.msra.mxu0 %v46
  %859 = vmatprep.subr.mxu0 0.0
  %860 = vmatpush1.msra.mxu0 %v47
  %861 = vmatprep.subr.mxu0 0.0
  %862 = vmatpush1.msra.mxu0 %v48
  %863 = vmatprep.subr.mxu0 0.0
  %864 = vmatpush1.msra.mxu0 %v49
  %865 = vmatprep.subr.mxu0 0.0
  %866 = vmatpush1.msra.mxu0 %v50
  %867 = vmatprep.subr.mxu0 0.0
  %868 = vmatpush1.msra.mxu0 %v51
  %869 = vmatprep.subr.mxu0 0.0
  %870 = vmatpush1.msra.mxu0 0.0
  %871 = vmatprep.subr.mxu0 0.0
  %872 = vmatpush1.msra.mxu0 0.0
  %873 = vmatprep.subr.mxu0 0.0
  %874 = vmatpush1.msra.mxu0 0.0
  %875 = vmatprep.subr.mxu0 0.0
  %876 = vmatpush1.msra.mxu0 0.0
  %877 = vmatprep.subr.mxu0 0.0
  %878 = vmatpush1.msra.mxu0 0.0
  %879 = vmatprep.subr.mxu0 0.0
  %880 = vmatpush1.msra.mxu0 0.0
  %881 = vmatprep.subr.mxu0 0.0
  %882 = vmatpush1.msra.mxu0 0.0
  %883 = vmatprep.subr.mxu0 0.0
  %884 = vmatpush1.msra.mxu0 0.0
  %885 = vmatprep.subr.mxu0 0.0
  %886 = vmatpush1.msra.mxu0 0.0
  %887 = vmatprep.subr.mxu0 0.0
  %888 = vmatpush1.msra.mxu0 0.0
  %889 = vmatprep.subr.mxu0 0.0
  %890 = vmatpush1.msra.mxu0 0.0
  %891 = vmatprep.subr.mxu0 0.0
  %892 = vmatpush1.msra.mxu0 0.0
  %893 = vmatprep.subr.mxu0 0.0
  %894 = vmatpush1.msra.mxu0 0.0
  %895 = vmatprep.subr.mxu0 0.0
  %896 = vmatpush1.msra.mxu0 0.0
  %897 = vmatprep.subr.mxu0 0.0
  %898 = vmatpush1.msra.mxu0 0.0
  %899 = vmatprep.subr.mxu0 0.0
  %900 = vmatpush1.msra.mxu0 0.0
  %901 = vmatprep.mubr.f32.mxu0 0.0
  %902 = vmatmul.mubr.f32.gmra.mrb[0].mxu0 %v765
  %v903 = vpop.f32.mrb[0].mxu0
  %v904 = vadd.f32 0.0, %v903
  %v905 = vpop.f32.mrb[0].mxu0
  %906 = vdwg.mxu0
  %v907 = vmul.f32 %v904, 0.001953125
  %v908 = vmul.f32 %v836, %v836
  %v909 = vsub.f32 %v907, %v908
  %v910 = vadd.f32 %v909, 1e-05
  %v911 = vrsqrt.pop %v910
  %v912 = vmul.f32 %v476, %v911
  %v913 = vmul.f32 %v836, %v912
  %v914 = vsub.f32 %v477, %v913
  %v916 = vlaneseq
  %v917 = vshrl.u32 %v916, 7
  %v918 = vsub.s32 0, %v917
  %v919 = vrot.slane %v912, %v918
  %v921 = vmul.f32 %v726, %v919
  %v922 = vmul.f32 %v731, %v919
  %v923 = vmul.f32 %v736, %v919
  %v924 = vmul.f32 %v741, %v919
  %v926 = vlaneseq
  %v927 = vshrl.u32 %v926, 7
  %v928 = vsub.s32 0, %v927
  %v929 = vrot.slane %v914, %v928
  %v931 = vadd.f32 %v921, %v929
  %v932 = vadd.f32 %v922, %v929
  %v933 = vadd.f32 %v923, %v929
  %v934 = vadd.f32 %v924, %v929
  %v935 = vmax.f32 %v931, 0.0
  %v936 = vmax.f32 %v932, 0.0
  %v937 = vmax.f32 %v933, 0.0
  %v938 = vmax.f32 %v934, 0.0
  %939 = vst [vmem:[%s9] sm:$0xff] %v935
  %940 = vst [vmem:[%s9 + $0x8] sm:$0xff] %v936
  %941 = vst [vmem:[%s9 + $0x10] sm:$0xff] %v937
  %942 = vst [vmem:[%s9 + $0x18] sm:$0xff] %v938
  // Predicated region
  $region38: #{double_conv.1} parent=0 // pred_check
    _
  $region39: #{double_conv.1} parent=0 // pred_check_branch
    %944 = sbr.rel (0) target = $region41
  $region40: #{double_conv.1} parent=0 // pred_region
    _
  $region41: #{double_conv.1} parent=0 // pred_fallthru
    _
  // Predicated region
  $region42: #{double_conv.1} parent=0 // pred_check
    _
  $region43: #{double_conv.1} parent=0 // pred_check_branch
    %946 = sbr.rel (0) target = $region45
  $region44: #{double_conv.1} parent=0 // pred_region
    _
  $region45: #{double_conv.1} parent=0 // pred_fallthru
    _

</llo_original>
